<compile_context>
chip_gen: v6e
topology: v6e:2x2x1
jax: 0.10.0
libtpu: 0.0.40
codegen_flags: <defaults>
</compile_context>

<pallas_src>
import jax
import jax.numpy as jnp
from jax.experimental import pallas as pl
from jax.experimental.pallas import tpu as pltpu


def attn_decoder_kernel(
    bias_ref,   # [3, BPAD] f32 : row0=[b_hh|b_comb|b_attn], row1=b_ih, row2=b_out
    emb_ref,    # [B, E]  f32
    h_ref,      # [B, Hd] f32
    enc_ref,    # [S, B, He] f32  (seq-major, no wrapper transpose)
    w1_ref,     # [E+Hd, 3Hd+He+S] bf16 fused block matrix (cols: gh | comb_e | scores)
    w_ca_ref,   # [He, He] bf16  attn_combine weight for attn_applied
    w_ih_ref,   # [He, 3Hd] bf16 GRU input-side weights (gate order r, z, n)
    w_out_ref,  # [Hd, V] bf16
    logp_ref,   # out [B, V]  f32
    h_out_ref,  # out [B, Hd] f32  (aliased onto the h input buffer)
    attnw_ref,  # out [B, S]  f32
):
    B, E = emb_ref.shape
    Hd = h_ref.shape[1]
    S, _, He = enc_ref.shape
    V = logp_ref.shape[1]
    G = 3 * Hd                       # fused GRU gate width
    N1 = G + He + S                  # fused matmul-1 output width

    emb = emb_ref[...]
    h = h_ref[...]

    # ---- fused matmul 1: GRU hidden gates + comb(emb part) + attention scores ----
    # Split-dot (emb-rows, h-rows) avoids materializing cat(emb, h) in VMEM.
    fused = (
        jnp.dot(emb.astype(jnp.bfloat16), w1_ref[0:E, :],
                preferred_element_type=jnp.float32)
        + jnp.dot(h.astype(jnp.bfloat16), w1_ref[E:E + Hd, :],
                  preferred_element_type=jnp.float32)
        + bias_ref[0:1, 0:N1]
    )                                                        # [B, N1]
    gh = fused[:, 0:G]                                       # h @ W_hh + b_hh (r|z|n)
    comb_e = fused[:, G:G + He]                              # emb @ W_comb_e + b_comb
    scores = fused[:, G + He:N1]                             # attn(cat(emb, h))

    # ---- softmax over source length (actual_src_length == max_src_length by the
    #      module's contract, so no padding mask is required) ----
    m = jnp.max(scores, axis=1, keepdims=True)
    e = jnp.exp(scores - m)
    aw = e / jnp.sum(e, axis=1, keepdims=True)               # [B, S]

    # ---- apply attention: applied[b] = sum_s aw[b, s] * enc[s, b, :] ----
    enc = enc_ref[...]                                       # [S, B, He]
    applied = aw[:, 0:1] * enc[0]
    for s in range(1, S):                                    # static unroll, S small
        applied = applied + aw[:, s:s + 1] * enc[s]          # [B, He]

    # ---- attn_combine + relu (embedded-token part already in comb_e) ----
    x = comb_e + jnp.dot(applied.astype(jnp.bfloat16), w_ca_ref[...],
                         preferred_element_type=jnp.float32)
    x = jnp.maximum(x, 0.0)                                  # [B, He]

    # ---- single-step GRU (gate order r, z, n to match torch.nn.GRU) ----
    gi = (jnp.dot(x.astype(jnp.bfloat16), w_ih_ref[...],
                  preferred_element_type=jnp.float32)
          + bias_ref[1:2, 0:G])                              # [B, 3Hd]
    r = jax.nn.sigmoid(gi[:, 0:Hd] + gh[:, 0:Hd])
    z = jax.nn.sigmoid(gi[:, Hd:2 * Hd] + gh[:, Hd:2 * Hd])
    n = jnp.tanh(gi[:, 2 * Hd:G] + r * gh[:, 2 * Hd:G])
    h_new = (1.0 - z) * n + z * h                            # [B, Hd]

    # ---- output projection + log_softmax over vocab ----
    logits = (jnp.dot(h_new.astype(jnp.bfloat16), w_out_ref[...],
                      preferred_element_type=jnp.float32)
              + bias_ref[2:3, 0:V])                          # [B, V]
    mx = jnp.max(logits, axis=1, keepdims=True)
    sh = logits - mx
    lse = jnp.log(jnp.sum(jnp.exp(sh), axis=1, keepdims=True))

    logp_ref[...] = sh - lse
    h_out_ref[...] = h_new
    attnw_ref[...] = aw


def init_params(key, *, embedding_size, decoder_hidden_size, encoder_hidden_size,
                max_src_length, output_size):
    """Raw parameters ([in, out] layout, f32), equivalent to the torch module."""
    E, Hd, He, S, V = (embedding_size, decoder_hidden_size, encoder_hidden_size,
                       max_src_length, output_size)
    ks = jax.random.split(key, 12)
    sc = 0.1
    return {
        "embedding": sc * jax.random.normal(ks[0], (V, E), jnp.float32),
        "w_attn_e":  sc * jax.random.normal(ks[1], (E, S), jnp.float32),
        "w_attn_h":  sc * jax.random.normal(ks[2], (Hd, S), jnp.float32),
        "b_attn":    sc * jax.random.normal(ks[3], (1, S), jnp.float32),
        "w_comb_e":  sc * jax.random.normal(ks[4], (E, He), jnp.float32),
        "w_comb_a":  sc * jax.random.normal(ks[5], (He, He), jnp.float32),
        "b_comb":    sc * jax.random.normal(ks[6], (1, He), jnp.float32),
        "w_ih":      sc * jax.random.normal(ks[7], (3, He, Hd), jnp.float32),
        "w_hh":      sc * jax.random.normal(ks[8], (3, Hd, Hd), jnp.float32),
        "b_ih":      sc * jax.random.normal(ks[9], (3, 1, Hd), jnp.float32),
        "b_hh":      sc * jax.random.normal(ks[10], (3, 1, Hd), jnp.float32),
        "w_out":     sc * jax.random.normal(ks[11], (Hd, V), jnp.float32),
        "b_out":     jnp.zeros((1, V), jnp.float32),
    }


def pack_params(p):
    """One-time fusion/packing of raw params into the kernel's operand layout."""
    E, S = p["w_attn_e"].shape
    Hd = p["w_attn_h"].shape[0]
    He = p["w_comb_a"].shape[0]
    V = p["w_out"].shape[1]
    G = 3 * Hd
    N1 = G + He + S

    w_hh_cat = jnp.concatenate([p["w_hh"][0], p["w_hh"][1], p["w_hh"][2]], axis=1)  # [Hd, 3Hd]
    w_ih_cat = jnp.concatenate([p["w_ih"][0], p["w_ih"][1], p["w_ih"][2]], axis=1)  # [He, 3Hd]
    b_hh_cat = p["b_hh"].reshape(1, G)
    b_ih_cat = p["b_ih"].reshape(1, G)

    # Fused block matrix, column layout [gh | comb_e | scores]:
    #   emb rows: [    0     | w_comb_e | w_attn_e ]
    #   h   rows: [ w_hh_cat |    0     | w_attn_h ]
    top = jnp.concatenate(
        [jnp.zeros((E, G), jnp.float32), p["w_comb_e"], p["w_attn_e"]], axis=1)
    bot = jnp.concatenate(
        [w_hh_cat, jnp.zeros((Hd, He), jnp.float32), p["w_attn_h"]], axis=1)
    w1 = jnp.concatenate([top, bot], axis=0)                                    # [E+Hd, N1]
    b1 = jnp.concatenate([b_hh_cat, p["b_comb"], p["b_attn"]], axis=1)          # [1, N1]

    bpad = ((max(N1, G, V) + 127) // 128) * 128

    def pad(b):
        return jnp.pad(b, ((0, 0), (0, bpad - b.shape[1])))

    bias_pack = jnp.concatenate([pad(b1), pad(b_ih_cat), pad(p["b_out"])], axis=0)

    return {
        "embedding": p["embedding"],                         # f32 gather table
        "bias_pack": bias_pack.astype(jnp.float32),          # [3, bpad]
        "w1":        w1.astype(jnp.bfloat16),
        "w_comb_a":  p["w_comb_a"].astype(jnp.bfloat16),
        "w_ih_cat":  w_ih_cat.astype(jnp.bfloat16),
        "w_out":     p["w_out"].astype(jnp.bfloat16),
    }


@jax.jit
def attn_decoder_forward(packed, input_tensor, hidden, encoder_outputs):
    """input_tensor: [1, B] int32; hidden: [1, B, Hd]; encoder_outputs: [S, B, He].

    Returns (log_probs [B, V], hidden [1, B, Hd], attn_weights [B, S]) — same
    semantics as AttnDecoderRNN.forward with num_hidden_layers=1 (eval mode).
    """
    B = input_tensor.shape[1]
    S = encoder_outputs.shape[0]
    Hd = hidden.shape[2]
    V = packed["w_out"].shape[1]

    # Embedding gather + eval-mode dropout (identity).
    # TODO(synk): nn.Dropout(p=0.1) treated as identity (eval mode); training parity
    # would need an in-kernel pltpu.prng_* mask.
    emb = jnp.take(packed["embedding"], input_tensor[0], axis=0)   # [B, E]
    h0 = hidden[0]
    # TODO(synk): kernel implements the single-layer GRU case (num_hidden_layers=1).

    vmem = pl.BlockSpec(memory_space=pltpu.MemorySpace.VMEM)
    logp, h_new, aw = pl.pallas_call(
        attn_decoder_kernel,
        out_shape=(
            jax.ShapeDtypeStruct((B, V), jnp.float32),
            jax.ShapeDtypeStruct((B, Hd), jnp.float32),
            jax.ShapeDtypeStruct((B, S), jnp.float32),
        ),
        in_specs=[vmem] * 8,
        out_specs=(vmem, vmem, vmem),
        input_output_aliases={2: 1},   # hidden-state input buffer reused for h_out
    )(
        packed["bias_pack"], emb, h0, encoder_outputs,
        packed["w1"], packed["w_comb_a"], packed["w_ih_cat"], packed["w_out"],
    )
    return logp, h_new[None], aw


def reference_forward(p, input_tensor, hidden, encoder_outputs):
    """Pure-JAX f32 reference (module semantics) used to validate the kernel."""
    emb = jnp.take(p["embedding"], input_tensor[0], axis=0)       # [B, E]
    h = hidden[0]                                                  # [B, Hd]
    Hd = h.shape[1]

    scores = emb @ p["w_attn_e"] + h @ p["w_attn_h"] + p["b_attn"]
    aw = jax.nn.softmax(scores, axis=1)                            # [B, S]
    applied = jnp.einsum("bs,sbh->bh", aw, encoder_outputs)        # [B, He]
    x = jax.nn.relu(emb @ p["w_comb_e"] + applied @ p["w_comb_a"] + p["b_comb"])

    w_ih = jnp.concatenate([p["w_ih"][0], p["w_ih"][1], p["w_ih"][2]], axis=1)
    w_hh = jnp.concatenate([p["w_hh"][0], p["w_hh"][1], p["w_hh"][2]], axis=1)
    gi = x @ w_ih + p["b_ih"].reshape(1, -1)
    gh = h @ w_hh + p["b_hh"].reshape(1, -1)
    r = jax.nn.sigmoid(gi[:, :Hd] + gh[:, :Hd])
    z = jax.nn.sigmoid(gi[:, Hd:2 * Hd] + gh[:, Hd:2 * Hd])
    n = jnp.tanh(gi[:, 2 * Hd:] + r * gh[:, 2 * Hd:])
    h_new = (1.0 - z) * n + z * h

    logits = h_new @ p["w_out"] + p["b_out"]
    logp = jax.nn.log_softmax(logits, axis=1)
    return logp, h_new[None], aw


if __name__ == "__main__":
    batch_size = 2
    embedding_size = 32
    decoder_hidden_size = 32
    encoder_hidden_size = 32
    max_src_length = 8          # actual_src_length == max_src_length
    num_hidden_layers = 1
    output_size = 64            # vocab

    key = jax.random.PRNGKey(0)
    k_par, k_tok, k_enc = jax.random.split(key, 3)

    params = init_params(
        k_par,
        embedding_size=embedding_size,
        decoder_hidden_size=decoder_hidden_size,
        encoder_hidden_size=encoder_hidden_size,
        max_src_length=max_src_length,
        output_size=output_size,
    )
    packed = pack_params(params)

    input_tensor = jax.random.randint(
        k_tok, (1, batch_size), 0, output_size, dtype=jnp.int32)               # [1, B]
    hidden = jnp.zeros(
        (num_hidden_layers, batch_size, decoder_hidden_size), jnp.float32)     # [L, B, Hd]
    encoder_outputs = jax.random.normal(
        k_enc, (max_src_length, batch_size, encoder_hidden_size), jnp.float32)  # [S, B, He]

    logp, new_hidden, attn_w = jax.block_until_ready(
        attn_decoder_forward(packed, input_tensor, hidden, encoder_outputs))

    # --- shape / sanity checks (module contract) ---
    assert logp.shape == (batch_size, output_size)
    assert new_hidden.shape == (num_hidden_layers, batch_size, decoder_hidden_size)
    assert attn_w.shape == (batch_size, max_src_length)
    assert bool(jnp.all(jnp.isfinite(logp)))
    assert bool(jnp.allclose(jnp.sum(jnp.exp(logp), axis=1), 1.0, atol=1e-4))
    assert bool(jnp.allclose(jnp.sum(attn_w, axis=1), 1.0, atol=1e-4))

    # --- numerical check vs. pure-JAX f32 reference (weights are bf16 in-kernel,
    #     so use loose tolerances in log-prob space) ---
    ref_logp, ref_hidden, ref_aw = reference_forward(
        params, input_tensor, hidden, encoder_outputs)
    assert bool(jnp.allclose(attn_w, ref_aw, atol=5e-3))
    assert bool(jnp.allclose(new_hidden, ref_hidden, atol=2e-2))
    assert bool(jnp.allclose(logp, ref_logp, atol=5e-2))

    print("KERNEL_OK")
</pallas_src>

<mosaic_0001>
module attributes {stable_mosaic.version = 11 : i64} {
  func.func @attn_decoder_kernel(%arg0: memref<3x256xf32, #tpu.memory_space<vmem>>, %arg1: memref<2x32xf32, #tpu.memory_space<vmem>>, %arg2: memref<2x32xf32, #tpu.memory_space<vmem>>, %arg3: memref<8x2x32xf32, #tpu.memory_space<vmem>>, %arg4: memref<64x136xbf16, #tpu.memory_space<vmem>>, %arg5: memref<32x32xbf16, #tpu.memory_space<vmem>>, %arg6: memref<32x96xbf16, #tpu.memory_space<vmem>>, %arg7: memref<32x64xbf16, #tpu.memory_space<vmem>>, %arg8: memref<2x64xf32, #tpu.memory_space<vmem>>, %arg9: memref<2x32xf32, #tpu.memory_space<vmem>>, %arg10: memref<2x8xf32, #tpu.memory_space<vmem>>) attributes {dimension_semantics = [], scalar_prefetch = 0 : i64, scratch_operands = 0 : i64, tpu.core_type = #tpu.core_type<tc>} {
    %c0 = arith.constant 0 : index
    %c0_0 = arith.constant 0 : index
    %0 = vector.load %arg1[%c0, %c0_0] : memref<2x32xf32, #tpu.memory_space<vmem>>, vector<2x32xf32>
    %c0_1 = arith.constant 0 : index
    %c0_2 = arith.constant 0 : index
    %1 = vector.load %arg2[%c0_1, %c0_2] : memref<2x32xf32, #tpu.memory_space<vmem>>, vector<2x32xf32>
    %2 = arith.truncf %0 : vector<2x32xf32> to vector<2x32xbf16>
    %c0_3 = arith.constant 0 : index
    %c0_4 = arith.constant 0 : index
    %3 = vector.load %arg4[%c0_3, %c0_4] : memref<64x136xbf16, #tpu.memory_space<vmem>>, vector<32x136xbf16>
    %cst = arith.constant dense<0.000000e+00> : vector<2x136xf32>
    %4 = tpu.matmul %2, %3, %cst {dimension_numbers = #tpu.dot_dimension_numbers<[1], [0], [0], [1], [0, 0, 1, 1], [], []>} : vector<2x32xbf16>, vector<32x136xbf16>, vector<2x136xf32> -> vector<2x136xf32>
    %5 = arith.truncf %1 : vector<2x32xf32> to vector<2x32xbf16>
    %c32 = arith.constant 32 : index
    %c0_5 = arith.constant 0 : index
    %6 = vector.load %arg4[%c32, %c0_5] : memref<64x136xbf16, #tpu.memory_space<vmem>>, vector<32x136xbf16>
    %cst_6 = arith.constant dense<0.000000e+00> : vector<2x136xf32>
    %7 = tpu.matmul %5, %6, %cst_6 {dimension_numbers = #tpu.dot_dimension_numbers<[1], [0], [0], [1], [0, 0, 1, 1], [], []>} : vector<2x32xbf16>, vector<32x136xbf16>, vector<2x136xf32> -> vector<2x136xf32>
    %8 = arith.addf %4, %7 : vector<2x136xf32>
    %c0_7 = arith.constant 0 : index
    %c0_8 = arith.constant 0 : index
    %9 = vector.load %arg0[%c0_7, %c0_8] : memref<3x256xf32, #tpu.memory_space<vmem>>, vector<1x136xf32>
    %10 = vector.broadcast %9 : vector<1x136xf32> to vector<2x136xf32>
    %11 = arith.addf %8, %10 : vector<2x136xf32>
    %12 = vector.extract_strided_slice %11 {offsets = [0, 0], sizes = [2, 96], strides = [1, 1]} : vector<2x136xf32> to vector<2x96xf32>
    %13 = vector.extract_strided_slice %11 {offsets = [0, 96], sizes = [2, 32], strides = [1, 1]} : vector<2x136xf32> to vector<2x32xf32>
    %14 = vector.extract_strided_slice %11 {offsets = [0, 128], sizes = [2, 8], strides = [1, 1]} : vector<2x136xf32> to vector<2x8xf32>
    %cst_9 = arith.constant dense<0xFF800000> : vector<2xf32>
    %15 = vector.multi_reduction <maximumf>, %14, %cst_9 [1] : vector<2x8xf32> to vector<2xf32>
    %16 = vector.shape_cast %15 : vector<2xf32> to vector<2x1xf32>
    %17 = vector.broadcast %16 : vector<2x1xf32> to vector<2x8xf32>
    %18 = arith.subf %14, %17 : vector<2x8xf32>
    %19 = math.exp %18 : vector<2x8xf32>
    %cst_10 = arith.constant dense<0.000000e+00> : vector<2xf32>
    %20 = vector.multi_reduction <add>, %19, %cst_10 [1] : vector<2x8xf32> to vector<2xf32>
    %21 = vector.shape_cast %20 : vector<2xf32> to vector<2x1xf32>
    %22 = vector.broadcast %21 : vector<2x1xf32> to vector<2x8xf32>
    %23 = arith.divf %19, %22 : vector<2x8xf32>
    %c0_11 = arith.constant 0 : index
    %c0_12 = arith.constant 0 : index
    %c0_13 = arith.constant 0 : index
    %24 = vector.load %arg3[%c0_11, %c0_12, %c0_13] : memref<8x2x32xf32, #tpu.memory_space<vmem>>, vector<8x2x32xf32>
    %25 = vector.extract_strided_slice %23 {offsets = [0, 0], sizes = [2, 1], strides = [1, 1]} : vector<2x8xf32> to vector<2x1xf32>
    %26 = vector.extract_strided_slice %24 {offsets = [0, 0, 0], sizes = [1, 2, 32], strides = [1, 1, 1]} : vector<8x2x32xf32> to vector<1x2x32xf32>
    %27 = vector.shape_cast %26 : vector<1x2x32xf32> to vector<2x32xf32>
    %28 = vector.broadcast %25 : vector<2x1xf32> to vector<2x32xf32>
    %29 = arith.mulf %28, %27 : vector<2x32xf32>
    %30 = vector.extract_strided_slice %23 {offsets = [0, 1], sizes = [2, 1], strides = [1, 1]} : vector<2x8xf32> to vector<2x1xf32>
    %31 = vector.extract_strided_slice %24 {offsets = [1, 0, 0], sizes = [1, 2, 32], strides = [1, 1, 1]} : vector<8x2x32xf32> to vector<1x2x32xf32>
    %32 = vector.shape_cast %31 : vector<1x2x32xf32> to vector<2x32xf32>
    %33 = vector.broadcast %30 : vector<2x1xf32> to vector<2x32xf32>
    %34 = arith.mulf %33, %32 : vector<2x32xf32>
    %35 = arith.addf %29, %34 : vector<2x32xf32>
    %36 = vector.extract_strided_slice %23 {offsets = [0, 2], sizes = [2, 1], strides = [1, 1]} : vector<2x8xf32> to vector<2x1xf32>
    %37 = vector.extract_strided_slice %24 {offsets = [2, 0, 0], sizes = [1, 2, 32], strides = [1, 1, 1]} : vector<8x2x32xf32> to vector<1x2x32xf32>
    %38 = vector.shape_cast %37 : vector<1x2x32xf32> to vector<2x32xf32>
    %39 = vector.broadcast %36 : vector<2x1xf32> to vector<2x32xf32>
    %40 = arith.mulf %39, %38 : vector<2x32xf32>
    %41 = arith.addf %35, %40 : vector<2x32xf32>
    %42 = vector.extract_strided_slice %23 {offsets = [0, 3], sizes = [2, 1], strides = [1, 1]} : vector<2x8xf32> to vector<2x1xf32>
    %43 = vector.extract_strided_slice %24 {offsets = [3, 0, 0], sizes = [1, 2, 32], strides = [1, 1, 1]} : vector<8x2x32xf32> to vector<1x2x32xf32>
    %44 = vector.shape_cast %43 : vector<1x2x32xf32> to vector<2x32xf32>
    %45 = vector.broadcast %42 : vector<2x1xf32> to vector<2x32xf32>
    %46 = arith.mulf %45, %44 : vector<2x32xf32>
    %47 = arith.addf %41, %46 : vector<2x32xf32>
    %48 = vector.extract_strided_slice %23 {offsets = [0, 4], sizes = [2, 1], strides = [1, 1]} : vector<2x8xf32> to vector<2x1xf32>
    %49 = vector.extract_strided_slice %24 {offsets = [4, 0, 0], sizes = [1, 2, 32], strides = [1, 1, 1]} : vector<8x2x32xf32> to vector<1x2x32xf32>
    %50 = vector.shape_cast %49 : vector<1x2x32xf32> to vector<2x32xf32>
    %51 = vector.broadcast %48 : vector<2x1xf32> to vector<2x32xf32>
    %52 = arith.mulf %51, %50 : vector<2x32xf32>
    %53 = arith.addf %47, %52 : vector<2x32xf32>
    %54 = vector.extract_strided_slice %23 {offsets = [0, 5], sizes = [2, 1], strides = [1, 1]} : vector<2x8xf32> to vector<2x1xf32>
    %55 = vector.extract_strided_slice %24 {offsets = [5, 0, 0], sizes = [1, 2, 32], strides = [1, 1, 1]} : vector<8x2x32xf32> to vector<1x2x32xf32>
    %56 = vector.shape_cast %55 : vector<1x2x32xf32> to vector<2x32xf32>
    %57 = vector.broadcast %54 : vector<2x1xf32> to vector<2x32xf32>
    %58 = arith.mulf %57, %56 : vector<2x32xf32>
    %59 = arith.addf %53, %58 : vector<2x32xf32>
    %60 = vector.extract_strided_slice %23 {offsets = [0, 6], sizes = [2, 1], strides = [1, 1]} : vector<2x8xf32> to vector<2x1xf32>
    %61 = vector.extract_strided_slice %24 {offsets = [6, 0, 0], sizes = [1, 2, 32], strides = [1, 1, 1]} : vector<8x2x32xf32> to vector<1x2x32xf32>
    %62 = vector.shape_cast %61 : vector<1x2x32xf32> to vector<2x32xf32>
    %63 = vector.broadcast %60 : vector<2x1xf32> to vector<2x32xf32>
    %64 = arith.mulf %63, %62 : vector<2x32xf32>
    %65 = arith.addf %59, %64 : vector<2x32xf32>
    %66 = vector.extract_strided_slice %23 {offsets = [0, 7], sizes = [2, 1], strides = [1, 1]} : vector<2x8xf32> to vector<2x1xf32>
    %67 = vector.extract_strided_slice %24 {offsets = [7, 0, 0], sizes = [1, 2, 32], strides = [1, 1, 1]} : vector<8x2x32xf32> to vector<1x2x32xf32>
    %68 = vector.shape_cast %67 : vector<1x2x32xf32> to vector<2x32xf32>
    %69 = vector.broadcast %66 : vector<2x1xf32> to vector<2x32xf32>
    %70 = arith.mulf %69, %68 : vector<2x32xf32>
    %71 = arith.addf %65, %70 : vector<2x32xf32>
    %72 = arith.truncf %71 : vector<2x32xf32> to vector<2x32xbf16>
    %c0_14 = arith.constant 0 : index
    %c0_15 = arith.constant 0 : index
    %73 = vector.load %arg5[%c0_14, %c0_15] : memref<32x32xbf16, #tpu.memory_space<vmem>>, vector<32x32xbf16>
    %cst_16 = arith.constant dense<0.000000e+00> : vector<2x32xf32>
    %74 = tpu.matmul %72, %73, %cst_16 {dimension_numbers = #tpu.dot_dimension_numbers<[1], [0], [0], [1], [0, 0, 1, 1], [], []>} : vector<2x32xbf16>, vector<32x32xbf16>, vector<2x32xf32> -> vector<2x32xf32>
    %75 = arith.addf %13, %74 : vector<2x32xf32>
    %cst_17 = arith.constant 0.000000e+00 : f32
    %76 = vector.broadcast %cst_17 : f32 to vector<2x32xf32>
    %77 = arith.maximumf %75, %76 : vector<2x32xf32>
    %78 = arith.truncf %77 : vector<2x32xf32> to vector<2x32xbf16>
    %c0_18 = arith.constant 0 : index
    %c0_19 = arith.constant 0 : index
    %79 = vector.load %arg6[%c0_18, %c0_19] : memref<32x96xbf16, #tpu.memory_space<vmem>>, vector<32x96xbf16>
    %cst_20 = arith.constant dense<0.000000e+00> : vector<2x96xf32>
    %80 = tpu.matmul %78, %79, %cst_20 {dimension_numbers = #tpu.dot_dimension_numbers<[1], [0], [0], [1], [0, 0, 1, 1], [], []>} : vector<2x32xbf16>, vector<32x96xbf16>, vector<2x96xf32> -> vector<2x96xf32>
    %c1 = arith.constant 1 : index
    %c0_21 = arith.constant 0 : index
    %81 = vector.load %arg0[%c1, %c0_21] : memref<3x256xf32, #tpu.memory_space<vmem>>, vector<1x96xf32>
    %82 = vector.broadcast %81 : vector<1x96xf32> to vector<2x96xf32>
    %83 = arith.addf %80, %82 : vector<2x96xf32>
    %84 = vector.extract_strided_slice %83 {offsets = [0, 0], sizes = [2, 32], strides = [1, 1]} : vector<2x96xf32> to vector<2x32xf32>
    %85 = vector.extract_strided_slice %12 {offsets = [0, 0], sizes = [2, 32], strides = [1, 1]} : vector<2x96xf32> to vector<2x32xf32>
    %86 = arith.addf %84, %85 : vector<2x32xf32>
    %87 = arith.negf %86 : vector<2x32xf32>
    %88 = math.exp %87 : vector<2x32xf32>
    %cst_22 = arith.constant 1.000000e+00 : f32
    %89 = vector.broadcast %cst_22 : f32 to vector<2x32xf32>
    %90 = arith.addf %89, %88 : vector<2x32xf32>
    %91 = arith.divf %89, %90 : vector<2x32xf32>
    %92 = vector.extract_strided_slice %83 {offsets = [0, 32], sizes = [2, 32], strides = [1, 1]} : vector<2x96xf32> to vector<2x32xf32>
    %93 = vector.extract_strided_slice %12 {offsets = [0, 32], sizes = [2, 32], strides = [1, 1]} : vector<2x96xf32> to vector<2x32xf32>
    %94 = arith.addf %92, %93 : vector<2x32xf32>
    %95 = arith.negf %94 : vector<2x32xf32>
    %96 = math.exp %95 : vector<2x32xf32>
    %cst_23 = arith.constant 1.000000e+00 : f32
    %97 = vector.broadcast %cst_23 : f32 to vector<2x32xf32>
    %98 = arith.addf %97, %96 : vector<2x32xf32>
    %99 = arith.divf %97, %98 : vector<2x32xf32>
    %100 = vector.extract_strided_slice %83 {offsets = [0, 64], sizes = [2, 32], strides = [1, 1]} : vector<2x96xf32> to vector<2x32xf32>
    %101 = vector.extract_strided_slice %12 {offsets = [0, 64], sizes = [2, 32], strides = [1, 1]} : vector<2x96xf32> to vector<2x32xf32>
    %102 = arith.mulf %91, %101 : vector<2x32xf32>
    %103 = arith.addf %100, %102 : vector<2x32xf32>
    %104 = math.tanh %103 : vector<2x32xf32>
    %cst_24 = arith.constant 1.000000e+00 : f32
    %105 = vector.broadcast %cst_24 : f32 to vector<2x32xf32>
    %106 = arith.subf %105, %99 : vector<2x32xf32>
    %107 = arith.mulf %106, %104 : vector<2x32xf32>
    %108 = arith.mulf %99, %1 : vector<2x32xf32>
    %109 = arith.addf %107, %108 : vector<2x32xf32>
    %110 = arith.truncf %109 : vector<2x32xf32> to vector<2x32xbf16>
    %c0_25 = arith.constant 0 : index
    %c0_26 = arith.constant 0 : index
    %111 = vector.load %arg7[%c0_25, %c0_26] : memref<32x64xbf16, #tpu.memory_space<vmem>>, vector<32x64xbf16>
    %cst_27 = arith.constant dense<0.000000e+00> : vector<2x64xf32>
    %112 = tpu.matmul %110, %111, %cst_27 {dimension_numbers = #tpu.dot_dimension_numbers<[1], [0], [0], [1], [0, 0, 1, 1], [], []>} : vector<2x32xbf16>, vector<32x64xbf16>, vector<2x64xf32> -> vector<2x64xf32>
    %c2 = arith.constant 2 : index
    %c0_28 = arith.constant 0 : index
    %113 = vector.load %arg0[%c2, %c0_28] : memref<3x256xf32, #tpu.memory_space<vmem>>, vector<1x64xf32>
    %114 = vector.broadcast %113 : vector<1x64xf32> to vector<2x64xf32>
    %115 = arith.addf %112, %114 : vector<2x64xf32>
    %cst_29 = arith.constant dense<0xFF800000> : vector<2xf32>
    %116 = vector.multi_reduction <maximumf>, %115, %cst_29 [1] : vector<2x64xf32> to vector<2xf32>
    %117 = vector.shape_cast %116 : vector<2xf32> to vector<2x1xf32>
    %118 = vector.broadcast %117 : vector<2x1xf32> to vector<2x64xf32>
    %119 = arith.subf %115, %118 : vector<2x64xf32>
    %120 = math.exp %119 : vector<2x64xf32>
    %cst_30 = arith.constant dense<0.000000e+00> : vector<2xf32>
    %121 = vector.multi_reduction <add>, %120, %cst_30 [1] : vector<2x64xf32> to vector<2xf32>
    %122 = vector.shape_cast %121 : vector<2xf32> to vector<2x1xf32>
    %123 = math.log %122 : vector<2x1xf32>
    %124 = vector.broadcast %123 : vector<2x1xf32> to vector<2x64xf32>
    %125 = arith.subf %119, %124 : vector<2x64xf32>
    %c0_31 = arith.constant 0 : index
    %c0_32 = arith.constant 0 : index
    %126 = vector.load %arg8[%c0_31, %c0_32] : memref<2x64xf32, #tpu.memory_space<vmem>>, vector<2x64xf32>
    tpu.vector_store %arg8[%c0_31, %c0_32], %125 {strides = array<i32>} : memref<2x64xf32, #tpu.memory_space<vmem>>, vector<2x64xf32>,
    %c0_33 = arith.constant 0 : index
    %c0_34 = arith.constant 0 : index
    %127 = vector.load %arg9[%c0_33, %c0_34] : memref<2x32xf32, #tpu.memory_space<vmem>>, vector<2x32xf32>
    tpu.vector_store %arg9[%c0_33, %c0_34], %109 {strides = array<i32>} : memref<2x32xf32, #tpu.memory_space<vmem>>, vector<2x32xf32>,
    %c0_35 = arith.constant 0 : index
    %c0_36 = arith.constant 0 : index
    %128 = vector.load %arg10[%c0_35, %c0_36] : memref<2x8xf32, #tpu.memory_space<vmem>>, vector<2x8xf32>
    tpu.vector_store %arg10[%c0_35, %c0_36], %23 {strides = array<i32>} : memref<2x8xf32, #tpu.memory_space<vmem>>, vector<2x8xf32>,
    return
  }
}

</mosaic_0001>

<llo_original>
// kernel: attn_decoder_forward.1
$region0: #{attn_decoder_forward.1}
  #allocation0 [shape = 'u32[]', space=smem, size = 0x4, offset = 0x4, fixed_abs, tag = 'smem constant byte address 0x4 - core index']
  #allocation1 [shape = 'u32[144,128]{1,0:T(1,128)}', space=vmem, size = 0x12000, scoped, tag = 'internal scratch']
  %s0 = inlined_call_operand.vmem [shape: f32[3,256], index: 0, kind: input, shape index: {}]
  %s1 = inlined_call_operand.vmem [shape: f32[2,32], index: 1, kind: input, shape index: {}]
  %s2 = inlined_call_operand.vmem [shape: f32[2,32], index: 2, kind: input, shape index: {}, may-alias: {2,9}]
  %s3 = inlined_call_operand.vmem [shape: f32[8,2,32], index: 3, kind: input, shape index: {}]
  %s4 = inlined_call_operand.vmem [shape: bf16[64,136], index: 4, kind: input, shape index: {}]
  %s5 = inlined_call_operand.vmem [shape: bf16[32,32], index: 5, kind: input, shape index: {}]
  %s6 = inlined_call_operand.vmem [shape: bf16[32,96], index: 6, kind: input, shape index: {}]
  %s7 = inlined_call_operand.vmem [shape: bf16[32,64], index: 7, kind: input, shape index: {}]
  %s8 = inlined_call_operand.hbm [shape: f32[2,64], index: 8, kind: output, shape index: {0}]
  %s9 = inlined_call_operand.vmem [shape: f32[2,32], index: 9, kind: output, shape index: {1}, may-alias: {2,9}]
  %s10 = inlined_call_operand.hbm [shape: f32[2,8], index: 10, kind: output, shape index: {2}]
  %11 = xla_tuple %s8, %s9, %s10
  %s12 = sld [smem:[#allocation0]]
  $region58: #{attn_decoder_forward.1} parent=0
    _
  %s14 = ssub.s32 1, %s12
  %s15 = scalar_select 0, %s14, %s12
  $region1: #{attn_decoder_forward.1} parent=0
    #allocation2 [shape = 'u8[1024]{0}', space=vmem, size = 0x400, scoped, tag = 'output window, operand 0, single buffered']
    #allocation3 [shape = 's32[1]{0}', space=sflag, size = 0x4, scoped, tag = 'scoped memory for attn_decoder_forward.1']
    #allocation4 [shape = 'u8[1024]{0}', space=vmem, size = 0x400, scoped, tag = 'output window, operand 2, single buffered']
    #allocation5 [shape = 's32[1]{0}', space=sflag, size = 0x4, scoped, tag = 'scoped memory for attn_decoder_forward.1']
    %16 = vsyncpa [#allocation3], 0
    %17 = vsyncpa [#allocation5], 0
    // Predicated region
    $region2: #{attn_decoder_forward.1} parent=1 // pred_check
      _
    $region3: #{attn_decoder_forward.1} parent=1 // pred_check_branch
      %19 = sbr.rel (0) target = $region5
    $region4: #{attn_decoder_forward.1} parent=1 // pred_region
      _
    $region5: #{attn_decoder_forward.1} parent=1 // pred_fallthru
      _
    // Predicated region
    $region6: #{attn_decoder_forward.1} parent=1 // pred_check
      _
    $region7: #{attn_decoder_forward.1} parent=1 // pred_check_branch
      %21 = sbr.rel (0) target = $region9
    $region8: #{attn_decoder_forward.1} parent=1 // pred_region
      _
    $region9: #{attn_decoder_forward.1} parent=1 // pred_fallthru
      _
    // Predicated region
    $region10: #{attn_decoder_forward.1} parent=1 // pred_check
      _
    $region11: #{attn_decoder_forward.1} parent=1 // pred_check_branch
      %23 = sbr.rel (0) target = $region13
    $region12: #{attn_decoder_forward.1} parent=1 // pred_region
      _
    $region13: #{attn_decoder_forward.1} parent=1 // pred_fallthru
      _
    // Predicated region
    $region14: #{attn_decoder_forward.1} parent=1 // pred_check
      _
    $region15: #{attn_decoder_forward.1} parent=1 // pred_check_branch
      %25 = sbr.rel (0) target = $region17
    $region16: #{attn_decoder_forward.1} parent=1 // pred_region
      _
    $region17: #{attn_decoder_forward.1} parent=1 // pred_fallthru
      _
    // Predicated region
    $region18: #{attn_decoder_forward.1} parent=1 // pred_check
      _
    $region19: #{attn_decoder_forward.1} parent=1 // pred_check_branch
      %27 = sbr.rel (0) target = $region21
    $region20: #{attn_decoder_forward.1} parent=1 // pred_region
      _
    $region21: #{attn_decoder_forward.1} parent=1 // pred_fallthru
      _
    // Predicated region
    $region22: #{attn_decoder_forward.1} parent=1 // pred_check
      _
    $region23: #{attn_decoder_forward.1} parent=1 // pred_check_branch
      %29 = sbr.rel (0) target = $region25
    $region24: #{attn_decoder_forward.1} parent=1 // pred_region
      _
    $region25: #{attn_decoder_forward.1} parent=1 // pred_fallthru
      _
    // Predicated region
    $region26: #{attn_decoder_forward.1} parent=1 // pred_check
      _
    $region27: #{attn_decoder_forward.1} parent=1 // pred_check_branch
      %31 = sbr.rel (0) target = $region29
    $region28: #{attn_decoder_forward.1} parent=1 // pred_region
      _
    $region29: #{attn_decoder_forward.1} parent=1 // pred_fallthru
      _
    // Predicated region
    $region30: #{attn_decoder_forward.1} parent=1 // pred_check
      _
    $region31: #{attn_decoder_forward.1} parent=1 // pred_check_branch
      %33 = sbr.rel (0) target = $region33
    $region32: #{attn_decoder_forward.1} parent=1 // pred_region
      _
    $region33: #{attn_decoder_forward.1} parent=1 // pred_fallthru
      _
    %v35 = vld [vmem:[%s1] sm:$0x3]
    %v36 = vld [vmem:[%s2] sm:$0x3]
    %v37 = vpack.c.bf16 %v35, %v35
    %v38 = vld [vmem:[%s4] sm:$0xff]
    %v39 = vld [vmem:[%s4 + $0x8] sm:$0xff]
    %v40 = vld [vmem:[%s4 + $0x10] sm:$0xff]
    %v41 = vld [vmem:[%s4 + $0x18] sm:$0xff]
    %v42 = vpack.c.bf16 %v36, %v36
    %v43 = vld [vmem:[%s4 + $0x20] sm:$0xff]
    %v44 = vld [vmem:[%s4 + $0x28] sm:$0xff]
    %v45 = vld [vmem:[%s4 + $0x30] sm:$0xff]
    %v46 = vld [vmem:[%s4 + $0x38] sm:$0xff]
    %v51 = vunpack.c.l.b16 %v43
    %v52 = vunpack.c.h.b16 %v43
    %v53 = vunpack.c.l.b16 %v44
    %v54 = vunpack.c.h.b16 %v44
    %v55 = vunpack.c.l.b16 %v45
    %v56 = vunpack.c.h.b16 %v45
    %v57 = vunpack.c.l.b16 %v46
    %v58 = vunpack.c.h.b16 %v46
    %v59 = vpack.c.b16 %v53, %v51
    %v60 = vpack.c.b16 %v54, %v52
    %v61 = vpack.c.b16 %v57, %v55
    %v62 = vpack.c.b16 %v58, %v56
    %vm67 = vcmask 261120
    %v69 = vsel %vm67, %v42, 0
    %71 = vmatprep.subr.bf16.mxu0 0
    %72 = vmatpush1.bf16.msra.mxu0 0
    %73 = vmatprep.subr.bf16.mxu0 0
    %74 = vmatpush1.bf16.msra.mxu0 0
    %75 = vmatprep.subr.bf16.mxu0 0
    %76 = vmatpush1.bf16.msra.mxu0 0
    %77 = vmatprep.subr.bf16.mxu0 0
    %78 = vmatpush1.bf16.msra.mxu0 0
    %79 = vmatprep.subr.bf16.mxu0 0
    %80 = vmatpush1.bf16.msra.mxu0 0
    %81 = vmatprep.subr.bf16.mxu0 0
    %82 = vmatpush1.bf16.msra.mxu0 0
    %83 = vmatprep.subr.bf16.mxu0 %v62
    %84 = vmatpush1.bf16.msra.mxu0 %v61
    %85 = vmatprep.subr.bf16.mxu0 %v60
    %86 = vmatpush1.bf16.msra.mxu0 %v59
    %87 = vmatprep.subr.bf16.mxu0 0
    %88 = vmatpush2.bf16.msra.mxu0 0
    %89 = vmatprep.subr.bf16.mxu0 0
    %90 = vmatpush2.bf16.msra.mxu0 0
    %91 = vmatprep.subr.bf16.mxu0 0
    %92 = vmatpush2.bf16.msra.mxu0 0
    %93 = vmatprep.subr.bf16.mxu0 0
    %94 = vmatpush2.bf16.msra.mxu0 0
    %95 = vmatprep.subr.bf16.mxu0 0
    %96 = vmatpush2.bf16.msra.mxu0 0
    %97 = vmatprep.subr.bf16.mxu0 0
    %98 = vmatpush2.bf16.msra.mxu0 0
    %99 = vmatprep.subr.bf16.mxu0 0
    %100 = vmatpush2.bf16.msra.mxu0 0
    %101 = vmatprep.subr.bf16.mxu0 0
    %102 = vmatpush2.bf16.msra.mxu0 0
    %103 = vmatprep.mubr.bf16.mxu0 0
    %104 = vmatmul.mubr.bf16.gmra.mxu0 %v69
    %v105 = vpop.f32.mrf.mxu0
    %v106 = vadd.f32 0.0, %v105
    %v107 = vpop.f32.mrf.mxu0
    %v108 = vadd.f32 0.0, %v107
    %v109 = vpop.f32.mrf.mxu0
    %v110 = vpop.f32.mrf.mxu0
    %111 = vdwg.mxu0
    %v116 = vunpack.c.l.b16 %v38
    %v117 = vunpack.c.h.b16 %v38
    %v118 = vunpack.c.l.b16 %v39
    %v119 = vunpack.c.h.b16 %v39
    %v120 = vunpack.c.l.b16 %v40
    %v121 = vunpack.c.h.b16 %v40
    %v122 = vunpack.c.l.b16 %v41
    %v123 = vunpack.c.h.b16 %v41
    %v124 = vpack.c.b16 %v118, %v116
    %v125 = vpack.c.b16 %v119, %v117
    %v126 = vpack.c.b16 %v122, %v120
    %v127 = vpack.c.b16 %v123, %v121
    %v133 = vsel %vm67, %v37, 0
    %135 = vmatprep.subr.bf16.mxu0 0
    %136 = vmatpush1.bf16.msra.mxu0 0
    %137 = vmatprep.subr.bf16.mxu0 0
    %138 = vmatpush1.bf16.msra.mxu0 0
    %139 = vmatprep.subr.bf16.mxu0 0
    %140 = vmatpush1.bf16.msra.mxu0 0
    %141 = vmatprep.subr.bf16.mxu0 0
    %142 = vmatpush1.bf16.msra.mxu0 0
    %143 = vmatprep.subr.bf16.mxu0 0
    %144 = vmatpush1.bf16.msra.mxu0 0
    %145 = vmatprep.subr.bf16.mxu0 0
    %146 = vmatpush1.bf16.msra.mxu0 0
    %147 = vmatprep.subr.bf16.mxu0 %v127
    %148 = vmatpush1.bf16.msra.mxu0 %v126
    %149 = vmatprep.subr.bf16.mxu0 %v125
    %150 = vmatpush1.bf16.msra.mxu0 %v124
    %151 = vmatprep.subr.bf16.mxu0 0
    %152 = vmatpush2.bf16.msra.mxu0 0
    %153 = vmatprep.subr.bf16.mxu0 0
    %154 = vmatpush2.bf16.msra.mxu0 0
    %155 = vmatprep.subr.bf16.mxu0 0
    %156 = vmatpush2.bf16.msra.mxu0 0
    %157 = vmatprep.subr.bf16.mxu0 0
    %158 = vmatpush2.bf16.msra.mxu0 0
    %159 = vmatprep.subr.bf16.mxu0 0
    %160 = vmatpush2.bf16.msra.mxu0 0
    %161 = vmatprep.subr.bf16.mxu0 0
    %162 = vmatpush2.bf16.msra.mxu0 0
    %163 = vmatprep.subr.bf16.mxu0 0
    %164 = vmatpush2.bf16.msra.mxu0 0
    %165 = vmatprep.subr.bf16.mxu0 0
    %166 = vmatpush2.bf16.msra.mxu0 0
    %167 = vmatprep.mubr.bf16.mxu0 0
    %168 = vmatmul.mubr.bf16.gmra.mxu0 %v133
    %v169 = vpop.f32.mrf.mxu0
    %v170 = vadd.f32 %v106, %v169
    %v171 = vpop.f32.mrf.mxu0
    %v172 = vadd.f32 %v108, %v171
    %v173 = vpop.f32.mrf.mxu0
    %v174 = vpop.f32.mrf.mxu0
    %175 = vdwg.mxu0
    %v176 = vld [vmem:[%s0] ss:$4 sm:$0x3]
    %v178 = vlaneseq
    %v179 = vshrl.u32 %v178, 7
    %v180 = vsub.s32 0, %v179
    %v181 = vrot.slane %v176, %v180
    %v182 = vlaneseq
    %v183 = vshrl.u32 %v182, 7
    %v184 = vsub.s32 1, %v183
    %v185 = vrot.slane %v176, %v184
    %v188 = vadd.f32 %v170, %v181
    %v189 = vadd.f32 %v172, %v185
    %vm190 = vcmask 58368
    %v191 = vsel %vm190, %v189, -inf
    %192 = vmax.xlane.f32.xlu0 %v191
    %v193 = vpop.xlane.xlu0 %192
    %v194 = vsub.f32 %v189, %v193
    %v195 = vmul.f32 %v194, 1.442695
    %v196 = vpow.pop %v195
    %v197 = vsel %vm190, %v196, 0.0
    %198 = vadd.xlane.f32.xlu0 %v197
    %v199 = vpop.xlane.xlu0 %198
    %v200 = vrcp.pop %v199
    %v201 = vmul.f32 %v196, %v200
    %v202 = vld [vmem:[%s3] sm:$0x3]
    %v203 = vld [vmem:[%s3 + $0x2] sm:$0x3]
    %v204 = vld [vmem:[%s3 + $0x4] sm:$0x3]
    %v205 = vld [vmem:[%s3 + $0x6] sm:$0x3]
    %v206 = vld [vmem:[%s3 + $0x8] sm:$0x3]
    %v207 = vld [vmem:[%s3 + $0xa] sm:$0x3]
    %v208 = vld [vmem:[%s3 + $0xc] sm:$0x3]
    %v209 = vld [vmem:[%s3 + $0xe] sm:$0x3]
    %211 = vset.pattern.permute.xlu0 0
    %212 = vperm.xlu0 %211, %v201
    %v213 = vpop.permute.xlu0 %212
    %v215 = vmul.f32 %v213, %v202
    %216 = vset.pattern.permute.xlu0 1
    %217 = vperm.xlu0 %216, %v201
    %v218 = vpop.permute.xlu0 %217
    %v220 = vmul.f32 %v218, %v203
    %v221 = vadd.f32 %v215, %v220
    %222 = vset.pattern.permute.xlu0 2
    %223 = vperm.xlu0 %222, %v201
    %v224 = vpop.permute.xlu0 %223
    %v226 = vmul.f32 %v224, %v204
    %v227 = vadd.f32 %v221, %v226
    %228 = vset.pattern.permute.xlu0 3
    %229 = vperm.xlu0 %228, %v201
    %v230 = vpop.permute.xlu0 %229
    %v232 = vmul.f32 %v230, %v205
    %v233 = vadd.f32 %v227, %v232
    %234 = vset.pattern.permute.xlu0 4
    %235 = vperm.xlu0 %234, %v201
    %v236 = vpop.permute.xlu0 %235
    %v238 = vmul.f32 %v236, %v206
    %v239 = vadd.f32 %v233, %v238
    %240 = vset.pattern.permute.xlu0 5
    %241 = vperm.xlu0 %240, %v201
    %v242 = vpop.permute.xlu0 %241
    %v244 = vmul.f32 %v242, %v207
    %v245 = vadd.f32 %v239, %v244
    %246 = vset.pattern.permute.xlu0 6
    %247 = vperm.xlu0 %246, %v201
    %v248 = vpop.permute.xlu0 %247
    %v250 = vmul.f32 %v248, %v208
    %v251 = vadd.f32 %v245, %v250
    %252 = vset.pattern.permute.xlu0 7
    %253 = vperm.xlu0 %252, %v201
    %v254 = vpop.permute.xlu0 %253
    %v256 = vmul.f32 %v254, %v209
    %v257 = vadd.f32 %v251, %v256
    %v258 = vpack.c.bf16 %v257, %v257
    %v259 = vld [vmem:[%s5] sm:$0xf]
    %v260 = vld [vmem:[%s5 + $0x4] sm:$0xf]
    %v261 = vld [vmem:[%s5 + $0x8] sm:$0xf]
    %v262 = vld [vmem:[%s5 + $0xc] sm:$0xf]
    %v267 = vunpack.c.l.b16 %v259
    %v268 = vunpack.c.l.b16 %v260
    %v269 = vunpack.c.l.b16 %v261
    %v270 = vunpack.c.l.b16 %v262
    %v271 = vpack.c.b16 %v268, %v267
    %v272 = vpack.c.b16 %v270, %v269
    %v276 = vsel %vm67, %v258, 0
    %278 = vmatprep.subr.bf16.mxu0 0
    %279 = vmatpush1.bf16.msra.mxu0 0
    %280 = vmatprep.subr.bf16.mxu0 0
    %281 = vmatpush1.bf16.msra.mxu0 0
    %282 = vmatprep.subr.bf16.mxu0 0
    %283 = vmatpush1.bf16.msra.mxu0 0
    %284 = vmatprep.subr.bf16.mxu0 0
    %285 = vmatpush1.bf16.msra.mxu0 0
    %286 = vmatprep.subr.bf16.mxu0 0
    %287 = vmatpush1.bf16.msra.mxu0 0
    %288 = vmatprep.subr.bf16.mxu0 0
    %289 = vmatpush1.bf16.msra.mxu0 0
    %290 = vmatprep.subr.bf16.mxu0 0
    %291 = vmatpush1.bf16.msra.mxu0 %v272
    %292 = vmatprep.subr.bf16.mxu0 0
    %293 = vmatpush1.bf16.msra.mxu0 %v271
    %294 = vmatprep.subr.bf16.mxu0 0
    %295 = vmatpush2.bf16.msra.mxu0 0
    %296 = vmatprep.subr.bf16.mxu0 0
    %297 = vmatpush2.bf16.msra.mxu0 0
    %298 = vmatprep.subr.bf16.mxu0 0
    %299 = vmatpush2.bf16.msra.mxu0 0
    %300 = vmatprep.subr.bf16.mxu0 0
    %301 = vmatpush2.bf16.msra.mxu0 0
    %302 = vmatprep.subr.bf16.mxu0 0
    %303 = vmatpush2.bf16.msra.mxu0 0
    %304 = vmatprep.subr.bf16.mxu0 0
    %305 = vmatpush2.bf16.msra.mxu0 0
    %306 = vmatprep.subr.bf16.mxu0 0
    %307 = vmatpush2.bf16.msra.mxu0 0
    %308 = vmatprep.subr.bf16.mxu0 0
    %309 = vmatpush2.bf16.msra.mxu0 0
    %310 = vmatprep.mubr.bf16.mxu0 0
    %311 = vmatmul.mubr.bf16.gmra.mxu0 %v276
    %v312 = vpop.f32.mrf.mxu0
    %v313 = vadd.f32 0.0, %v312
    %v314 = vpop.f32.mrf.mxu0
    %v315 = vpop.f32.mrf.mxu0
    %v316 = vpop.f32.mrf.mxu0
    %317 = vdwg.mxu0
    %319 = vrot.lane.b32.xlu0 %v313, 96
    %v320 = vpop.permute.xlu0 %319
    %v322 = vadd.f32 %v188, %v320
    %v323 = vmax.f32 %v322, 0.0
    %v324 = vpack.c.bf16 %v323, %v323
    %v325 = vld [vmem:[%s6] sm:$0xf]
    %v326 = vld [vmem:[%s6 + $0x4] sm:$0xf]
    %v327 = vld [vmem:[%s6 + $0x8] sm:$0xf]
    %v328 = vld [vmem:[%s6 + $0xc] sm:$0xf]
    %v329 = vld [vmem:[%s0 + $0x1] sm:$0x1]
    %v330 = vlaneseq
    %v331 = vshrl.u32 %v330, 7
    %v332 = vsub.s32 0, %v331
    %v333 = vrot.slane %v329, %v332
    %335 = vrot.lane.b32.xlu0 %v324, 32
    %v336 = vpop.permute.xlu0 %335
    %v341 = vunpack.c.l.b16 %v325
    %v342 = vunpack.c.l.b16 %v326
    %v343 = vunpack.c.l.b16 %v327
    %v344 = vunpack.c.l.b16 %v328
    %v345 = vpack.c.b16 %v342, %v341
    %v346 = vpack.c.b16 %v344, %v343
    %v350 = vsel %vm67, %v336, 0
    %352 = vmatprep.subr.bf16.mxu0 0
    %353 = vmatpush1.bf16.msra.mxu0 0
    %354 = vmatprep.subr.bf16.mxu0 0
    %355 = vmatpush1.bf16.msra.mxu0 0
    %356 = vmatprep.subr.bf16.mxu0 0
    %357 = vmatpush1.bf16.msra.mxu0 0
    %358 = vmatprep.subr.bf16.mxu0 0
    %359 = vmatpush1.bf16.msra.mxu0 0
    %360 = vmatprep.subr.bf16.mxu0 0
    %361 = vmatpush1.bf16.msra.mxu0 0
    %362 = vmatprep.subr.bf16.mxu0 0
    %363 = vmatpush1.bf16.msra.mxu0 0
    %364 = vmatprep.subr.bf16.mxu0 0
    %365 = vmatpush1.bf16.msra.mxu0 %v346
    %366 = vmatprep.subr.bf16.mxu0 0
    %367 = vmatpush1.bf16.msra.mxu0 %v345
    %368 = vmatprep.subr.bf16.mxu0 0
    %369 = vmatpush2.bf16.msra.mxu0 0
    %370 = vmatprep.subr.bf16.mxu0 0
    %371 = vmatpush2.bf16.msra.mxu0 0
    %372 = vmatprep.subr.bf16.mxu0 0
    %373 = vmatpush2.bf16.msra.mxu0 0
    %374 = vmatprep.subr.bf16.mxu0 0
    %375 = vmatpush2.bf16.msra.mxu0 0
    %376 = vmatprep.subr.bf16.mxu0 0
    %377 = vmatpush2.bf16.msra.mxu0 0
    %378 = vmatprep.subr.bf16.mxu0 0
    %379 = vmatpush2.bf16.msra.mxu0 0
    %380 = vmatprep.subr.bf16.mxu0 0
    %381 = vmatpush2.bf16.msra.mxu0 0
    %382 = vmatprep.subr.bf16.mxu0 0
    %383 = vmatpush2.bf16.msra.mxu0 0
    %384 = vmatprep.mubr.bf16.mxu0 0
    %385 = vmatmul.mubr.bf16.gmra.mxu0 %v350
    %v386 = vpop.f32.mrf.mxu0
    %v387 = vadd.f32 %v333, %v386
    %v388 = vpop.f32.mrf.mxu0
    %v389 = vpop.f32.mrf.mxu0
    %v390 = vpop.f32.mrf.mxu0
    %391 = vdwg.mxu0
    %v392 = vadd.f32 %v387, %v188
    %v393 = vxor.u32 %v392, 2147483648
    %v394 = vmul.f32 %v393, 1.442695
    %v395 = vpow.pop %v394
    %v396 = vadd.f32 %v395, 1.0
    %v397 = vrcp.pop %v396
    %v398 = vmul.f32 1.0, %v397
    %400 = vrot.lane.b32.xlu0 %v188, 64
    %v401 = vpop.permute.xlu0 %400
    %v403 = vmul.f32 %v398, %v401
    %405 = vrot.lane.b32.xlu0 %v403, 64
    %v406 = vpop.permute.xlu0 %405
    %v408 = vadd.f32 %v387, %v406
    %v409 = vtanh.pop %v408
    %v410 = vsub.f32 1.0, %v398
    %412 = vrot.lane.b32.xlu0 %v409, 96
    %v413 = vpop.permute.xlu0 %412
    %v415 = vmul.f32 %v410, %v413
    %417 = vrot.lane.b32.xlu0 %v36, 32
    %v418 = vpop.permute.xlu0 %417
    %v420 = vmul.f32 %v398, %v418
    %v421 = vadd.f32 %v415, %v420
    %v422 = vpack.c.bf16 %v421, %v421
    %v423 = vld [vmem:[%s7] sm:$0xf]
    %v424 = vld [vmem:[%s7 + $0x4] sm:$0xf]
    %v425 = vld [vmem:[%s7 + $0x8] sm:$0xf]
    %v426 = vld [vmem:[%s7 + $0xc] sm:$0xf]
    %v427 = vld [vmem:[%s0 + $0x2] sm:$0x1]
    %v428 = vlaneseq
    %v429 = vshrl.u32 %v428, 7
    %v430 = vsub.s32 0, %v429
    %v431 = vrot.slane %v427, %v430
    %433 = vrot.lane.b32.xlu0 %v422, 96
    %v434 = vpop.permute.xlu0 %433
    %v439 = vunpack.c.l.b16 %v423
    %v440 = vunpack.c.l.b16 %v424
    %v441 = vunpack.c.l.b16 %v425
    %v442 = vunpack.c.l.b16 %v426
    %v443 = vpack.c.b16 %v440, %v439
    %v444 = vpack.c.b16 %v442, %v441
    %v448 = vsel %vm67, %v434, 0
    %450 = vmatprep.subr.bf16.mxu0 0
    %451 = vmatpush1.bf16.msra.mxu0 0
    %452 = vmatprep.subr.bf16.mxu0 0
    %453 = vmatpush1.bf16.msra.mxu0 0
    %454 = vmatprep.subr.bf16.mxu0 0
    %455 = vmatpush1.bf16.msra.mxu0 0
    %456 = vmatprep.subr.bf16.mxu0 0
    %457 = vmatpush1.bf16.msra.mxu0 0
    %458 = vmatprep.subr.bf16.mxu0 0
    %459 = vmatpush1.bf16.msra.mxu0 0
    %460 = vmatprep.subr.bf16.mxu0 0
    %461 = vmatpush1.bf16.msra.mxu0 0
    %462 = vmatprep.subr.bf16.mxu0 0
    %463 = vmatpush1.bf16.msra.mxu0 %v444
    %464 = vmatprep.subr.bf16.mxu0 0
    %465 = vmatpush1.bf16.msra.mxu0 %v443
    %466 = vmatprep.subr.bf16.mxu0 0
    %467 = vmatpush2.bf16.msra.mxu0 0
    %468 = vmatprep.subr.bf16.mxu0 0
    %469 = vmatpush2.bf16.msra.mxu0 0
    %470 = vmatprep.subr.bf16.mxu0 0
    %471 = vmatpush2.bf16.msra.mxu0 0
    %472 = vmatprep.subr.bf16.mxu0 0
    %473 = vmatpush2.bf16.msra.mxu0 0
    %474 = vmatprep.subr.bf16.mxu0 0
    %475 = vmatpush2.bf16.msra.mxu0 0
    %476 = vmatprep.subr.bf16.mxu0 0
    %477 = vmatpush2.bf16.msra.mxu0 0
    %478 = vmatprep.subr.bf16.mxu0 0
    %479 = vmatpush2.bf16.msra.mxu0 0
    %480 = vmatprep.subr.bf16.mxu0 0
    %481 = vmatpush2.bf16.msra.mxu0 0
    %482 = vmatprep.mubr.bf16.mxu0 0
    %483 = vmatmul.mubr.bf16.gmra.mxu0 %v448
    %v484 = vpop.f32.mrf.mxu0
    %v485 = vadd.f32 %v431, %v484
    %v486 = vpop.f32.mrf.mxu0
    %v487 = vpop.f32.mrf.mxu0
    %v488 = vpop.f32.mrf.mxu0
    %489 = vdwg.mxu0
    %vm490 = vcmask 517120
    %v491 = vsel %vm490, %v485, -inf
    %492 = vmax.xlane.f32.xlu0 %v491
    %v493 = vpop.xlane.xlu0 %492
    %v494 = vsub.f32 %v485, %v493
    %v495 = vmul.f32 %v494, 1.442695
    %v496 = vpow.pop %v495
    %v497 = vsel %vm490, %v496, 0.0
    %498 = vadd.xlane.f32.xlu0 %v497
    %v499 = vpop.xlane.xlu0 %498
    %v500 = vlog2.pop %v499
    %v501 = vmul.f32 %v500, 0.6931472
    %v502 = vsub.f32 %v494, %v501
    %503 = vst.msk [vmem:[#allocation2] sm:$0x3] %vm490, %v502
    %505 = vrot.lane.b32.xlu0 %v421, 96
    %v506 = vpop.permute.xlu0 %505
    %vm508 = vcmask 254976
    %509 = vst.msk [vmem:[%s9] sm:$0x3] %vm508, %v506
    %510 = vst.msk [vmem:[#allocation4] sm:$0x3] %vm190, %v201
    // Predicated region
    $region34: #{attn_decoder_forward.1} parent=1 // pred_check
      _
    $region35: #{attn_decoder_forward.1} parent=1 // pred_check_branch
      %512 = sbr.rel (0) target = $region37
    $region36: #{attn_decoder_forward.1} parent=1 // pred_region
      %s514 = ssub.s32 32, 32
      %515 = vsyncadd [#allocation3], %s514
      %s517 = sshll.u32 [#allocation2], 4
      %s518 = int_to_ptr.vmem [resolvable:$true] %s517
      %520 = dma.vmem_to_hbm [thread:$0]  %s518, 32, %s8, [#allocation3]
    $region37: #{attn_decoder_forward.1} parent=1 // pred_fallthru
      _
    // Predicated region
    $region38: #{attn_decoder_forward.1} parent=1 // pred_check
      _
    $region39: #{attn_decoder_forward.1} parent=1 // pred_check_branch
      %522 = sbr.rel (0) target = $region41
    $region40: #{attn_decoder_forward.1} parent=1 // pred_region
      _
    $region41: #{attn_decoder_forward.1} parent=1 // pred_fallthru
      _
    // Predicated region
    $region42: #{attn_decoder_forward.1} parent=1 // pred_check
      _
    $region43: #{attn_decoder_forward.1} parent=1 // pred_check_branch
      %524 = sbr.rel (0) target = $region45
    $region44: #{attn_decoder_forward.1} parent=1 // pred_region
      %s526 = ssub.s32 32, 32
      %527 = vsyncadd [#allocation5], %s526
      %s529 = sshll.u32 [#allocation4], 4
      %s530 = int_to_ptr.vmem [resolvable:$true] %s529
      %532 = dma.vmem_to_hbm [thread:$0]  %s530, 32, %s10, [#allocation5]
    $region45: #{attn_decoder_forward.1} parent=1 // pred_fallthru
      _
    // Predicated region
    $region46: #{attn_decoder_forward.1} parent=1 // pred_check
      _
    $region47: #{attn_decoder_forward.1} parent=1 // pred_check_branch
      %534 = sbr.rel (0) target = $region49
    $region48: #{attn_decoder_forward.1} parent=1 // pred_region
      %535 = dma.done [#allocation3], 32
    $region49: #{attn_decoder_forward.1} parent=1 // pred_fallthru
      _
    // Predicated region
    $region50: #{attn_decoder_forward.1} parent=1 // pred_check
      _
    $region51: #{attn_decoder_forward.1} parent=1 // pred_check_branch
      %537 = sbr.rel (0) target = $region53
    $region52: #{attn_decoder_forward.1} parent=1 // pred_region
      _
    $region53: #{attn_decoder_forward.1} parent=1 // pred_fallthru
      _
    // Predicated region
    $region54: #{attn_decoder_forward.1} parent=1 // pred_check
      _
    $region55: #{attn_decoder_forward.1} parent=1 // pred_check_branch
      %539 = sbr.rel (0) target = $region57
    $region56: #{attn_decoder_forward.1} parent=1 // pred_region
      %540 = dma.done [#allocation5], 32
    $region57: #{attn_decoder_forward.1} parent=1 // pred_fallthru
      _
    %541 = vsyncpa [#allocation3], 1
    %542 = vsyncpa [#allocation5], 1

</llo_original>
